<compile_context>
chip_gen: v6e
topology: v6e:2x2x1
jax: 0.10.0
libtpu: 0.0.40
codegen_flags: <defaults>
</compile_context>

<pallas_src>
import jax
import jax.numpy as jnp
from jax import lax
from jax.experimental import pallas as pl
from jax.experimental.pallas import tpu as pltpu


def _disc_kernel(x_ref, w1_ref, b1_ref, w2_ref, b2_ref, w3_ref, b3_ref, oT_ref):
    # x_ref is (tm, C0) in its native layout; contract dim 1 of w1 with dim 1
    # of x so the result lands directly in the lane-dense (C1, tm) layout.
    h = lax.dot_general(
        w1_ref[...], x_ref[...],
        dimension_numbers=(((1,), (1,)), ((), ())),
        preferred_element_type=jnp.float32)
    h = jnp.maximum(h + b1_ref[...], 0.0)
    # conv2 (1x1) + ReLU  -> (C2, tm)
    h = jnp.dot(w2_ref[...], h, preferred_element_type=jnp.float32)
    h = jnp.maximum(h + b2_ref[...], 0.0)
    # conv3 (1x1) + ReLU  -> (2, tm)
    h = jnp.dot(w3_ref[...], h, preferred_element_type=jnp.float32)
    h = jnp.maximum(h + b3_ref[...], 0.0)
    oT_ref[...] = h.astype(oT_ref.dtype)


def _round_up(v, m):
    return ((v + m - 1) // m) * m


def _choose_tm(n, tm_max=8192):
    """Pick a lane-dense batch tile: multiple of 128 (or the whole batch),
    big enough to amortize per-step overhead, small enough that the grid has
    at least 2 steps for megacore (v7x) when N allows it."""
    if n <= 128:
        return n
    tm_cap = max(128, (tm_max // 128) * 128)
    return min(tm_cap, _round_up(pl.cdiv(n, 2), 128))


def discriminator_forward(x, params, *, tm=None):
    """x: (N, C0) float32.  Returns (N, 2) float32, matching the PyTorch forward."""
    w1, b1, w2, b2, w3, b3 = params
    n, c0 = x.shape
    c1 = w1.shape[0]
    c2 = w2.shape[0]
    c_out = w3.shape[0]

    if tm is None:
        tm = _choose_tm(n)
    else:
        tm = min(tm, n)
        if tm < n:
            tm = max(128, (tm // 128) * 128)  # lane-axis constraint on output tile

    grid = (pl.cdiv(n, tm),)

    # Deeper input pipeline only pays off when there are multiple grid steps.
    x_spec_kwargs = {}
    if grid[0] > 1:
        x_spec_kwargs["pipeline_mode"] = pl.Buffered(3)
    x_spec = pl.BlockSpec((tm, c0), lambda i: (i, 0), **x_spec_kwargs)

    flops = 2 * n * (c0 * c1 + c1 * c2 + c2 * c_out)
    bytes_accessed = 4 * (n * c0 + n * c_out
                          + c1 * c0 + c1 + c2 * c1 + c2 + c_out * c2 + c_out)

    out_t = pl.pallas_call(
        _disc_kernel,
        out_shape=jax.ShapeDtypeStruct((c_out, n), jnp.float32),
        grid_spec=pltpu.PrefetchScalarGridSpec(
            num_scalar_prefetch=0,
            grid=grid,
            in_specs=[
                # streamed activation tiles in native (N, C0) layout
                x_spec,
                # weights / biases: whole arrays, VMEM-resident across the grid
                pl.BlockSpec((c1, c0), lambda i: (0, 0)),
                pl.BlockSpec((c1, 1), lambda i: (0, 0)),
                pl.BlockSpec((c2, c1), lambda i: (0, 0)),
                pl.BlockSpec((c2, 1), lambda i: (0, 0)),
                pl.BlockSpec((c_out, c2), lambda i: (0, 0)),
                pl.BlockSpec((c_out, 1), lambda i: (0, 0)),
            ],
            out_specs=pl.BlockSpec((c_out, tm), lambda i: (0, i)),
        ),
        compiler_params=pltpu.CompilerParams(
            dimension_semantics=("parallel",),
        ),
        cost_estimate=pl.CostEstimate(
            flops=flops, transcendentals=0, bytes_accessed=bytes_accessed),
    )(x, w1, b1, w2, b2, w3, b3)

    # Tiny (2, N) -> (N, 2) transpose to preserve the module's output layout.
    return out_t.T


def init_params(key, outputs_size, K=2):
    """Deterministic synthetic parameters matching nn.Conv2d(...) shapes.

    PyTorch stores conv weights as (C_out, C_in, 1, 1); we keep the squeezed
    (C_out, C_in) layout (directly usable in the kernel) and biases as
    (C_out, 1) columns."""
    c0 = outputs_size
    c1 = c0 // K
    c2 = c1 // K
    c3 = 2
    keys = jax.random.split(key, 6)

    def mk_w(k, c_out, c_in):
        bound = 1.0 / jnp.sqrt(c_in)
        return jax.random.uniform(k, (c_out, c_in), jnp.float32, -bound, bound)

    def mk_b(k, c_out, c_in):
        bound = 1.0 / jnp.sqrt(c_in)
        return jax.random.uniform(k, (c_out, 1), jnp.float32, -bound, bound)

    w1 = mk_w(keys[0], c1, c0); b1 = mk_b(keys[1], c1, c0)
    w2 = mk_w(keys[2], c2, c1); b2 = mk_b(keys[3], c2, c1)
    w3 = mk_w(keys[4], c3, c2); b3 = mk_b(keys[5], c3, c2)
    return (w1, b1, w2, b2, w3, b3)


def _reference_forward(x, params):
    w1, b1, w2, b2, w3, b3 = params
    h = jnp.maximum(x @ w1.T + b1.T, 0.0)
    h = jnp.maximum(h @ w2.T + b2.T, 0.0)
    h = jnp.maximum(h @ w3.T + b3.T, 0.0)
    return h


if __name__ == "__main__":
    outputs_size = 32  # channel dim of the input features
    K = 2
    batch = 8

    key = jax.random.PRNGKey(0)
    kx, kp, kx2 = jax.random.split(key, 3)
    params = init_params(kp, outputs_size, K)

    # Small run (single grid step, tile == full batch).
    x = jax.random.normal(kx, (batch, outputs_size), jnp.float32)
    out = jax.block_until_ready(discriminator_forward(x, params))
    ref = _reference_forward(x, params)
    assert out.shape == (batch, 2)
    assert jnp.allclose(out, ref, atol=1e-5, rtol=1e-5)

    # Tiled run: multiple grid steps incl. a partial final batch tile and a
    # 3-deep buffered input pipeline.
    x2 = jax.random.normal(kx2, (300, outputs_size), jnp.float32)
    out2 = jax.block_until_ready(discriminator_forward(x2, params, tm=128))
    ref2 = _reference_forward(x2, params)
    assert out2.shape == (300, 2)
    assert jnp.allclose(out2, ref2, atol=1e-5, rtol=1e-5)

    # Auto-tiled run exercising the default tile-size heuristic (>=2 steps).
    x3 = jax.random.normal(kx, (512, outputs_size), jnp.float32)
    out3 = jax.block_until_ready(discriminator_forward(x3, params))
    ref3 = _reference_forward(x3, params)
    assert out3.shape == (512, 2)
    assert jnp.allclose(out3, ref3, atol=1e-5, rtol=1e-5)

    print("KERNEL_OK")
</pallas_src>

<mosaic_0001>
module attributes {stable_mosaic.version = 11 : i64} {
  func.func @_disc_kernel(%arg0: i32, %arg1: memref<8x32xf32, #tpu.memory_space<vmem>>, %arg2: memref<16x32xf32, #tpu.memory_space<vmem>>, %arg3: memref<16x1xf32, #tpu.memory_space<vmem>>, %arg4: memref<8x16xf32, #tpu.memory_space<vmem>>, %arg5: memref<8x1xf32, #tpu.memory_space<vmem>>, %arg6: memref<2x8xf32, #tpu.memory_space<vmem>>, %arg7: memref<2x1xf32, #tpu.memory_space<vmem>>, %arg8: memref<2x8xf32, #tpu.memory_space<vmem>>) attributes {dimension_semantics = [#tpu.dimension_semantics<parallel>], iteration_bounds = array<i64: 1>, scalar_prefetch = 0 : i64, scratch_operands = 0 : i64, tpu.core_type = #tpu.core_type<tc>, window_params = [{transform_indices = @transform_0, window_bounds = array<i64: 8, 32>}, {pipeline_mode = #tpu.pipeline_mode<synchronous>, transform_indices = @transform_1, window_bounds = array<i64: 16, 32>}, {pipeline_mode = #tpu.pipeline_mode<synchronous>, transform_indices = @transform_2, window_bounds = array<i64: 16, 1>}, {pipeline_mode = #tpu.pipeline_mode<synchronous>, transform_indices = @transform_3, window_bounds = array<i64: 8, 16>}, {pipeline_mode = #tpu.pipeline_mode<synchronous>, transform_indices = @transform_4, window_bounds = array<i64: 8, 1>}, {pipeline_mode = #tpu.pipeline_mode<synchronous>, transform_indices = @transform_5, window_bounds = array<i64: 2, 8>}, {pipeline_mode = #tpu.pipeline_mode<synchronous>, transform_indices = @transform_6, window_bounds = array<i64: 2, 1>}, {transform_indices = @transform_7, window_bounds = array<i64: 2, 8>}]} {
    %c0 = arith.constant 0 : index
    %c0_0 = arith.constant 0 : index
    %0 = vector.load %arg2[%c0, %c0_0] : memref<16x32xf32, #tpu.memory_space<vmem>>, vector<16x32xf32>
    %c0_1 = arith.constant 0 : index
    %c0_2 = arith.constant 0 : index
    %1 = vector.load %arg1[%c0_1, %c0_2] : memref<8x32xf32, #tpu.memory_space<vmem>>, vector<8x32xf32>
    %cst = arith.constant dense<0.000000e+00> : vector<16x8xf32>
    %2 = tpu.matmul %0, %1, %cst {dimension_numbers = #tpu.dot_dimension_numbers<[1], [1], [0], [0], [0, 0, 1, 0], [], []>} : vector<16x32xf32>, vector<8x32xf32>, vector<16x8xf32> -> vector<16x8xf32>
    %c0_3 = arith.constant 0 : index
    %c0_4 = arith.constant 0 : index
    %3 = vector.load %arg3[%c0_3, %c0_4] : memref<16x1xf32, #tpu.memory_space<vmem>>, vector<16x1xf32>
    %4 = vector.broadcast %3 : vector<16x1xf32> to vector<16x8xf32>
    %5 = arith.addf %2, %4 : vector<16x8xf32>
    %cst_5 = arith.constant 0.000000e+00 : f32
    %6 = vector.broadcast %cst_5 : f32 to vector<16x8xf32>
    %7 = arith.maximumf %5, %6 : vector<16x8xf32>
    %c0_6 = arith.constant 0 : index
    %c0_7 = arith.constant 0 : index
    %8 = vector.load %arg4[%c0_6, %c0_7] : memref<8x16xf32, #tpu.memory_space<vmem>>, vector<8x16xf32>
    %cst_8 = arith.constant dense<0.000000e+00> : vector<8x8xf32>
    %9 = tpu.matmul %8, %7, %cst_8 {dimension_numbers = #tpu.dot_dimension_numbers<[1], [0], [0], [1], [0, 0, 1, 1], [], []>} : vector<8x16xf32>, vector<16x8xf32>, vector<8x8xf32> -> vector<8x8xf32>
    %c0_9 = arith.constant 0 : index
    %c0_10 = arith.constant 0 : index
    %10 = vector.load %arg5[%c0_9, %c0_10] : memref<8x1xf32, #tpu.memory_space<vmem>>, vector<8x1xf32>
    %11 = vector.broadcast %10 : vector<8x1xf32> to vector<8x8xf32>
    %12 = arith.addf %9, %11 : vector<8x8xf32>
    %cst_11 = arith.constant 0.000000e+00 : f32
    %13 = vector.broadcast %cst_11 : f32 to vector<8x8xf32>
    %14 = arith.maximumf %12, %13 : vector<8x8xf32>
    %c0_12 = arith.constant 0 : index
    %c0_13 = arith.constant 0 : index
    %15 = vector.load %arg6[%c0_12, %c0_13] : memref<2x8xf32, #tpu.memory_space<vmem>>, vector<2x8xf32>
    %cst_14 = arith.constant dense<0.000000e+00> : vector<2x8xf32>
    %16 = tpu.matmul %15, %14, %cst_14 {dimension_numbers = #tpu.dot_dimension_numbers<[1], [0], [0], [1], [0, 0, 1, 1], [], []>} : vector<2x8xf32>, vector<8x8xf32>, vector<2x8xf32> -> vector<2x8xf32>
    %c0_15 = arith.constant 0 : index
    %c0_16 = arith.constant 0 : index
    %17 = vector.load %arg7[%c0_15, %c0_16] : memref<2x1xf32, #tpu.memory_space<vmem>>, vector<2x1xf32>
    %18 = vector.broadcast %17 : vector<2x1xf32> to vector<2x8xf32>
    %19 = arith.addf %16, %18 : vector<2x8xf32>
    %cst_17 = arith.constant 0.000000e+00 : f32
    %20 = vector.broadcast %cst_17 : f32 to vector<2x8xf32>
    %21 = arith.maximumf %19, %20 : vector<2x8xf32>
    %c0_18 = arith.constant 0 : index
    %c0_19 = arith.constant 0 : index
    %22 = vector.load %arg8[%c0_18, %c0_19] : memref<2x8xf32, #tpu.memory_space<vmem>>, vector<2x8xf32>
    tpu.vector_store %arg8[%c0_18, %c0_19], %21 {strides = array<i32>} : memref<2x8xf32, #tpu.memory_space<vmem>>, vector<2x8xf32>,
    return
  }
  func.func @transform_0(%arg0: i32) -> (i32, i32) {
    %c0_i32 = arith.constant 0 : i32
    %c0_i32_0 = arith.constant 0 : i32
    return %arg0, %c0_i32 : i32, i32
  }
  func.func @transform_1(%arg0: i32) -> (i32, i32) {
    %c0_i32 = arith.constant 0 : i32
    %c0_i32_0 = arith.constant 0 : i32
    %c0_i32_1 = arith.constant 0 : i32
    return %c0_i32, %c0_i32_0 : i32, i32
  }
  func.func @transform_2(%arg0: i32) -> (i32, i32) {
    %c0_i32 = arith.constant 0 : i32
    %c0_i32_0 = arith.constant 0 : i32
    %c0_i32_1 = arith.constant 0 : i32
    return %c0_i32, %c0_i32_0 : i32, i32
  }
  func.func @transform_3(%arg0: i32) -> (i32, i32) {
    %c0_i32 = arith.constant 0 : i32
    %c0_i32_0 = arith.constant 0 : i32
    %c0_i32_1 = arith.constant 0 : i32
    return %c0_i32, %c0_i32_0 : i32, i32
  }
  func.func @transform_4(%arg0: i32) -> (i32, i32) {
    %c0_i32 = arith.constant 0 : i32
    %c0_i32_0 = arith.constant 0 : i32
    %c0_i32_1 = arith.constant 0 : i32
    return %c0_i32, %c0_i32_0 : i32, i32
  }
  func.func @transform_5(%arg0: i32) -> (i32, i32) {
    %c0_i32 = arith.constant 0 : i32
    %c0_i32_0 = arith.constant 0 : i32
    %c0_i32_1 = arith.constant 0 : i32
    return %c0_i32, %c0_i32_0 : i32, i32
  }
  func.func @transform_6(%arg0: i32) -> (i32, i32) {
    %c0_i32 = arith.constant 0 : i32
    %c0_i32_0 = arith.constant 0 : i32
    %c0_i32_1 = arith.constant 0 : i32
    return %c0_i32, %c0_i32_0 : i32, i32
  }
  func.func @transform_7(%arg0: i32) -> (i32, i32) {
    %c0_i32 = arith.constant 0 : i32
    %c0_i32_0 = arith.constant 0 : i32
    return %c0_i32, %arg0 : i32, i32
  }
}

</mosaic_0001>

<llo_original>
// kernel: tpu_custom_call.1
$region0: #{tpu_custom_call.1}
  #allocation0 [shape = 'u32[]', space=smem, size = 0x4, offset = 0x4, fixed_abs, tag = 'smem constant byte address 0x4 - core index']
  #allocation1 [shape = 'u32[144,128]{1,0:T(1,128)}', space=vmem, size = 0x12000, scoped, tag = 'internal scratch']
  %s0 = inlined_call_operand.vmem [shape: f32[8,32], index: 0, kind: input, shape index: {}]
  %s1 = inlined_call_operand.vmem [shape: f32[16,32], index: 1, kind: input, shape index: {}]
  %s2 = inlined_call_operand.vmem [shape: f32[16,1], index: 2, kind: input, shape index: {}]
  %s3 = inlined_call_operand.vmem [shape: f32[8,16], index: 3, kind: input, shape index: {}]
  %s4 = inlined_call_operand.vmem [shape: f32[8,1], index: 4, kind: input, shape index: {}]
  %s5 = inlined_call_operand.vmem [shape: f32[2,8], index: 5, kind: input, shape index: {}]
  %s6 = inlined_call_operand.vmem [shape: f32[2,1], index: 6, kind: input, shape index: {}]
  %s7 = inlined_call_operand.hbm [shape: f32[2,8], index: 7, kind: output, shape index: {}]
  %s8 = sld [smem:[#allocation0]]
  $region38: #{tpu_custom_call.1} parent=0
    _
  %s10 = ssub.s32 1, %s8
  %s11 = scalar_select 0, %s10, %s8
  $region1: #{tpu_custom_call.1} parent=0
    #allocation2 [shape = 'u8[1024]{0}', space=vmem, size = 0x400, scoped, tag = 'output window, operand 0, single buffered']
    #allocation3 [shape = 's32[1]{0}', space=sflag, size = 0x4, scoped, tag = 'scoped memory for tpu_custom_call.1']
    %12 = vsyncpa [#allocation3], 0
    // Predicated region
    $region2: #{tpu_custom_call.1} parent=1 // pred_check
      _
    $region3: #{tpu_custom_call.1} parent=1 // pred_check_branch
      %14 = sbr.rel (0) target = $region5
    $region4: #{tpu_custom_call.1} parent=1 // pred_region
      _
    $region5: #{tpu_custom_call.1} parent=1 // pred_fallthru
      _
    // Predicated region
    $region6: #{tpu_custom_call.1} parent=1 // pred_check
      _
    $region7: #{tpu_custom_call.1} parent=1 // pred_check_branch
      %16 = sbr.rel (0) target = $region9
    $region8: #{tpu_custom_call.1} parent=1 // pred_region
      _
    $region9: #{tpu_custom_call.1} parent=1 // pred_fallthru
      _
    // Predicated region
    $region10: #{tpu_custom_call.1} parent=1 // pred_check
      _
    $region11: #{tpu_custom_call.1} parent=1 // pred_check_branch
      %18 = sbr.rel (0) target = $region13
    $region12: #{tpu_custom_call.1} parent=1 // pred_region
      _
    $region13: #{tpu_custom_call.1} parent=1 // pred_fallthru
      _
    // Predicated region
    $region14: #{tpu_custom_call.1} parent=1 // pred_check
      _
    $region15: #{tpu_custom_call.1} parent=1 // pred_check_branch
      %20 = sbr.rel (0) target = $region17
    $region16: #{tpu_custom_call.1} parent=1 // pred_region
      _
    $region17: #{tpu_custom_call.1} parent=1 // pred_fallthru
      _
    // Predicated region
    $region18: #{tpu_custom_call.1} parent=1 // pred_check
      _
    $region19: #{tpu_custom_call.1} parent=1 // pred_check_branch
      %22 = sbr.rel (0) target = $region21
    $region20: #{tpu_custom_call.1} parent=1 // pred_region
      _
    $region21: #{tpu_custom_call.1} parent=1 // pred_fallthru
      _
    // Predicated region
    $region22: #{tpu_custom_call.1} parent=1 // pred_check
      _
    $region23: #{tpu_custom_call.1} parent=1 // pred_check_branch
      %24 = sbr.rel (0) target = $region25
    $region24: #{tpu_custom_call.1} parent=1 // pred_region
      _
    $region25: #{tpu_custom_call.1} parent=1 // pred_fallthru
      _
    // Predicated region
    $region26: #{tpu_custom_call.1} parent=1 // pred_check
      _
    $region27: #{tpu_custom_call.1} parent=1 // pred_check_branch
      %26 = sbr.rel (0) target = $region29
    $region28: #{tpu_custom_call.1} parent=1 // pred_region
      _
    $region29: #{tpu_custom_call.1} parent=1 // pred_fallthru
      _
    %v27 = vld [vmem:[%s1] sm:$0xff]
    %v28 = vld [vmem:[%s1 + $0x8] sm:$0xff]
    %v29 = vld [vmem:[%s0] sm:$0xff]
    %v30 = vld [vmem:[%s2] sm:$0xff]
    %v31 = vld [vmem:[%s2 + $0x8] sm:$0xff]
    %33 = vset.pattern.permute.xlu0 0
    %34 = vperm.xlu0 %33, %v30
    %v35 = vpop.permute.xlu0 %34
    %38 = vset.pattern.permute.xlu0 0
    %39 = vperm.xlu0 %38, %v31
    %v40 = vpop.permute.xlu0 %39
    %vm42 = vcmask 261120
    %v44 = vsel %vm42, %v27, 0
    %v47 = vsel %vm42, %v28, 0
    %v50 = vsel %vm42, %v29, 0
    %52 = vmatprep.subr.mxu0 0.0
    %53 = vmatpush1.xpose.msra.mxu0 0.0
    %54 = vmatprep.subr.mxu0 0.0
    %55 = vmatpush1.xpose.msra.mxu0 0.0
    %56 = vmatprep.subr.mxu0 0.0
    %57 = vmatpush1.xpose.msra.mxu0 0.0
    %58 = vmatprep.subr.mxu0 0.0
    %59 = vmatpush1.xpose.msra.mxu0 0.0
    %60 = vmatprep.subr.mxu0 0.0
    %61 = vmatpush1.xpose.msra.mxu0 0.0
    %62 = vmatprep.subr.mxu0 0.0
    %63 = vmatpush1.xpose.msra.mxu0 0.0
    %64 = vmatprep.subr.mxu0 0.0
    %65 = vmatpush1.xpose.msra.mxu0 0.0
    %66 = vmatprep.subr.mxu0 0.0
    %67 = vmatpush1.xpose.msra.mxu0 0.0
    %68 = vmatprep.subr.mxu0 0.0
    %69 = vmatpush1.xpose.msra.mxu0 0.0
    %70 = vmatprep.subr.mxu0 0.0
    %71 = vmatpush1.xpose.msra.mxu0 0.0
    %72 = vmatprep.subr.mxu0 0.0
    %73 = vmatpush1.xpose.msra.mxu0 0.0
    %74 = vmatprep.subr.mxu0 0.0
    %75 = vmatpush1.xpose.msra.mxu0 0.0
    %76 = vmatprep.subr.mxu0 0.0
    %77 = vmatpush1.xpose.msra.mxu0 0.0
    %78 = vmatprep.subr.mxu0 0.0
    %79 = vmatpush1.xpose.msra.mxu0 0.0
    %80 = vmatprep.subr.mxu0 0.0
    %81 = vmatpush1.xpose.msra.mxu0 0.0
    %82 = vmatprep.subr.mxu0 0.0
    %83 = vmatpush1.xpose.msra.mxu0 %v50
    %84 = vmatprep.subr.mxu0 0.0
    %85 = vmatpush2.xpose.msra.mxu0 0.0
    %86 = vmatprep.subr.mxu0 0.0
    %87 = vmatpush2.xpose.msra.mxu0 0.0
    %88 = vmatprep.subr.mxu0 0.0
    %89 = vmatpush2.xpose.msra.mxu0 0.0
    %90 = vmatprep.subr.mxu0 0.0
    %91 = vmatpush2.xpose.msra.mxu0 0.0
    %92 = vmatprep.subr.mxu0 0.0
    %93 = vmatpush2.xpose.msra.mxu0 0.0
    %94 = vmatprep.subr.mxu0 0.0
    %95 = vmatpush2.xpose.msra.mxu0 0.0
    %96 = vmatprep.subr.mxu0 0.0
    %97 = vmatpush2.xpose.msra.mxu0 0.0
    %98 = vmatprep.subr.mxu0 0.0
    %99 = vmatpush2.xpose.msra.mxu0 0.0
    %100 = vmatprep.subr.mxu0 0.0
    %101 = vmatpush2.xpose.msra.mxu0 0.0
    %102 = vmatprep.subr.mxu0 0.0
    %103 = vmatpush2.xpose.msra.mxu0 0.0
    %104 = vmatprep.subr.mxu0 0.0
    %105 = vmatpush2.xpose.msra.mxu0 0.0
    %106 = vmatprep.subr.mxu0 0.0
    %107 = vmatpush2.xpose.msra.mxu0 0.0
    %108 = vmatprep.subr.mxu0 0.0
    %109 = vmatpush2.xpose.msra.mxu0 0.0
    %110 = vmatprep.subr.mxu0 0.0
    %111 = vmatpush2.xpose.msra.mxu0 0.0
    %112 = vmatprep.subr.mxu0 0.0
    %113 = vmatpush2.xpose.msra.mxu0 0.0
    %114 = vmatprep.subr.mxu0 0.0
    %115 = vmatpush2.xpose.msra.mxu0 0.0
    %116 = vmatprep.mubr.f32.mxu0 0.0
    %117 = vmatmul.mubr.f32.gmra.mxu0 %v44
    %v118 = vpop.f32.mrf.mxu0
    %v119 = vadd.f32 %v35, %v118
    %v120 = vpop.f32.mrf.mxu0
    %121 = vmatprep.mubr.f32.mxu0 0.0
    %122 = vmatmul.mubr.f32.gmra.mxu0 %v47
    %v123 = vpop.f32.mrf.mxu0
    %v124 = vadd.f32 %v40, %v123
    %v125 = vpop.f32.mrf.mxu0
    %126 = vdwg.mxu0
    %v127 = vmax.f32 %v119, 0.0
    %v128 = vmax.f32 %v124, 0.0
    %v129 = vld [vmem:[%s3] sm:$0xff]
    %v130 = vld [vmem:[%s4] sm:$0xff]
    %132 = vset.pattern.permute.xlu0 0
    %133 = vperm.xlu0 %132, %v130
    %v134 = vpop.permute.xlu0 %133
    %vm136 = vcmask 130048
    %v138 = vsel %vm136, %v129, 0
    %140 = vmatprep.subr.mxu0 0.0
    %141 = vmatpush1.msra.mxu0 0.0
    %142 = vmatprep.subr.mxu0 0.0
    %143 = vmatpush1.msra.mxu0 0.0
    %144 = vmatprep.subr.mxu0 0.0
    %145 = vmatpush1.msra.mxu0 0.0
    %146 = vmatprep.subr.mxu0 0.0
    %147 = vmatpush1.msra.mxu0 0.0
    %148 = vmatprep.subr.mxu0 0.0
    %149 = vmatpush1.msra.mxu0 0.0
    %150 = vmatprep.subr.mxu0 0.0
    %151 = vmatpush1.msra.mxu0 0.0
    %152 = vmatprep.subr.mxu0 0.0
    %153 = vmatpush1.msra.mxu0 0.0
    %154 = vmatprep.subr.mxu0 0.0
    %155 = vmatpush1.msra.mxu0 0.0
    %156 = vmatprep.subr.mxu0 0.0
    %157 = vmatpush1.msra.mxu0 0.0
    %158 = vmatprep.subr.mxu0 0.0
    %159 = vmatpush1.msra.mxu0 0.0
    %160 = vmatprep.subr.mxu0 0.0
    %161 = vmatpush1.msra.mxu0 0.0
    %162 = vmatprep.subr.mxu0 0.0
    %163 = vmatpush1.msra.mxu0 0.0
    %164 = vmatprep.subr.mxu0 0.0
    %165 = vmatpush1.msra.mxu0 0.0
    %166 = vmatprep.subr.mxu0 0.0
    %167 = vmatpush1.msra.mxu0 0.0
    %168 = vmatprep.subr.mxu0 0.0
    %169 = vmatpush1.msra.mxu0 %v128
    %170 = vmatprep.subr.mxu0 0.0
    %171 = vmatpush1.msra.mxu0 %v127
    %172 = vmatprep.subr.mxu0 0.0
    %173 = vmatpush2.msra.mxu0 0.0
    %174 = vmatprep.subr.mxu0 0.0
    %175 = vmatpush2.msra.mxu0 0.0
    %176 = vmatprep.subr.mxu0 0.0
    %177 = vmatpush2.msra.mxu0 0.0
    %178 = vmatprep.subr.mxu0 0.0
    %179 = vmatpush2.msra.mxu0 0.0
    %180 = vmatprep.subr.mxu0 0.0
    %181 = vmatpush2.msra.mxu0 0.0
    %182 = vmatprep.subr.mxu0 0.0
    %183 = vmatpush2.msra.mxu0 0.0
    %184 = vmatprep.subr.mxu0 0.0
    %185 = vmatpush2.msra.mxu0 0.0
    %186 = vmatprep.subr.mxu0 0.0
    %187 = vmatpush2.msra.mxu0 0.0
    %188 = vmatprep.subr.mxu0 0.0
    %189 = vmatpush2.msra.mxu0 0.0
    %190 = vmatprep.subr.mxu0 0.0
    %191 = vmatpush2.msra.mxu0 0.0
    %192 = vmatprep.subr.mxu0 0.0
    %193 = vmatpush2.msra.mxu0 0.0
    %194 = vmatprep.subr.mxu0 0.0
    %195 = vmatpush2.msra.mxu0 0.0
    %196 = vmatprep.subr.mxu0 0.0
    %197 = vmatpush2.msra.mxu0 0.0
    %198 = vmatprep.subr.mxu0 0.0
    %199 = vmatpush2.msra.mxu0 0.0
    %200 = vmatprep.subr.mxu0 0.0
    %201 = vmatpush2.msra.mxu0 0.0
    %202 = vmatprep.subr.mxu0 0.0
    %203 = vmatpush2.msra.mxu0 0.0
    %204 = vmatprep.mubr.f32.mxu0 0.0
    %205 = vmatmul.mubr.f32.gmra.mxu0 %v138
    %v206 = vpop.f32.mrf.mxu0
    %v207 = vadd.f32 %v134, %v206
    %v208 = vpop.f32.mrf.mxu0
    %209 = vdwg.mxu0
    %v210 = vmax.f32 %v207, 0.0
    %v211 = vld [vmem:[%s5] sm:$0x3]
    %v212 = vld [vmem:[%s6] sm:$0x3]
    %214 = vset.pattern.permute.xlu0 0
    %215 = vperm.xlu0 %214, %v212
    %v216 = vpop.permute.xlu0 %215
    %vm218 = vcmask 64512
    %v220 = vsel %vm218, %v211, 0
    %222 = vmatprep.subr.mxu0 0.0
    %223 = vmatpush1.msra.mxu0 0.0
    %224 = vmatprep.subr.mxu0 0.0
    %225 = vmatpush1.msra.mxu0 0.0
    %226 = vmatprep.subr.mxu0 0.0
    %227 = vmatpush1.msra.mxu0 0.0
    %228 = vmatprep.subr.mxu0 0.0
    %229 = vmatpush1.msra.mxu0 0.0
    %230 = vmatprep.subr.mxu0 0.0
    %231 = vmatpush1.msra.mxu0 0.0
    %232 = vmatprep.subr.mxu0 0.0
    %233 = vmatpush1.msra.mxu0 0.0
    %234 = vmatprep.subr.mxu0 0.0
    %235 = vmatpush1.msra.mxu0 0.0
    %236 = vmatprep.subr.mxu0 0.0
    %237 = vmatpush1.msra.mxu0 0.0
    %238 = vmatprep.subr.mxu0 0.0
    %239 = vmatpush1.msra.mxu0 0.0
    %240 = vmatprep.subr.mxu0 0.0
    %241 = vmatpush1.msra.mxu0 0.0
    %242 = vmatprep.subr.mxu0 0.0
    %243 = vmatpush1.msra.mxu0 0.0
    %244 = vmatprep.subr.mxu0 0.0
    %245 = vmatpush1.msra.mxu0 0.0
    %246 = vmatprep.subr.mxu0 0.0
    %247 = vmatpush1.msra.mxu0 0.0
    %248 = vmatprep.subr.mxu0 0.0
    %249 = vmatpush1.msra.mxu0 0.0
    %250 = vmatprep.subr.mxu0 0.0
    %251 = vmatpush1.msra.mxu0 0.0
    %252 = vmatprep.subr.mxu0 0.0
    %253 = vmatpush1.msra.mxu0 %v210
    %254 = vmatprep.subr.mxu0 0.0
    %255 = vmatpush2.msra.mxu0 0.0
    %256 = vmatprep.subr.mxu0 0.0
    %257 = vmatpush2.msra.mxu0 0.0
    %258 = vmatprep.subr.mxu0 0.0
    %259 = vmatpush2.msra.mxu0 0.0
    %260 = vmatprep.subr.mxu0 0.0
    %261 = vmatpush2.msra.mxu0 0.0
    %262 = vmatprep.subr.mxu0 0.0
    %263 = vmatpush2.msra.mxu0 0.0
    %264 = vmatprep.subr.mxu0 0.0
    %265 = vmatpush2.msra.mxu0 0.0
    %266 = vmatprep.subr.mxu0 0.0
    %267 = vmatpush2.msra.mxu0 0.0
    %268 = vmatprep.subr.mxu0 0.0
    %269 = vmatpush2.msra.mxu0 0.0
    %270 = vmatprep.subr.mxu0 0.0
    %271 = vmatpush2.msra.mxu0 0.0
    %272 = vmatprep.subr.mxu0 0.0
    %273 = vmatpush2.msra.mxu0 0.0
    %274 = vmatprep.subr.mxu0 0.0
    %275 = vmatpush2.msra.mxu0 0.0
    %276 = vmatprep.subr.mxu0 0.0
    %277 = vmatpush2.msra.mxu0 0.0
    %278 = vmatprep.subr.mxu0 0.0
    %279 = vmatpush2.msra.mxu0 0.0
    %280 = vmatprep.subr.mxu0 0.0
    %281 = vmatpush2.msra.mxu0 0.0
    %282 = vmatprep.subr.mxu0 0.0
    %283 = vmatpush2.msra.mxu0 0.0
    %284 = vmatprep.subr.mxu0 0.0
    %285 = vmatpush2.msra.mxu0 0.0
    %286 = vmatprep.mubr.f32.mxu0 0.0
    %287 = vmatmul.mubr.f32.gmra.mxu0 %v220
    %v288 = vpop.f32.mrf.mxu0
    %v289 = vadd.f32 %v216, %v288
    %v290 = vpop.f32.mrf.mxu0
    %291 = vdwg.mxu0
    %v292 = vmax.f32 %v289, 0.0
    %vm293 = vcmask 58368
    %294 = vst.msk [vmem:[#allocation2] sm:$0x3] %vm293, %v292
    // Predicated region
    $region30: #{tpu_custom_call.1} parent=1 // pred_check
      _
    $region31: #{tpu_custom_call.1} parent=1 // pred_check_branch
      %296 = sbr.rel (0) target = $region33
    $region32: #{tpu_custom_call.1} parent=1 // pred_region
      %s298 = ssub.s32 32, 32
      %299 = vsyncadd [#allocation3], %s298
      %s301 = sshll.u32 [#allocation2], 4
      %s302 = int_to_ptr.vmem [resolvable:$true] %s301
      %304 = dma.vmem_to_hbm [thread:$0]  %s302, 32, %s7, [#allocation3]
    $region33: #{tpu_custom_call.1} parent=1 // pred_fallthru
      _
    // Predicated region
    $region34: #{tpu_custom_call.1} parent=1 // pred_check
      _
    $region35: #{tpu_custom_call.1} parent=1 // pred_check_branch
      %306 = sbr.rel (0) target = $region37
    $region36: #{tpu_custom_call.1} parent=1 // pred_region
      %307 = dma.done [#allocation3], 32
    $region37: #{tpu_custom_call.1} parent=1 // pred_fallthru
      _
    %308 = vsyncpa [#allocation3], 1

</llo_original>
